<compile_context>
chip_gen: v7x
topology: tpu7x:2x2x1
jax: 0.10.0
libtpu: 0.0.40
codegen_flags: <defaults>
</compile_context>

<pallas_src>
import jax
import jax.numpy as jnp
import numpy as np
from jax.experimental import pallas as pl
from jax.experimental.pallas import tpu as pltpu


_VMEM_LIMIT_BYTES = 48 * 1024 * 1024   # > default scoped limit, < v7x's 64 MiB physical


# ----------------------------------------------------------------------------
# small host-side helpers
# ----------------------------------------------------------------------------
def _round_up(x, m):
    return (x + m - 1) // m * m


def _ll_pad(h, w):
    return _round_up((h + 2) * (w + 2), 128)


_ROLL_SIGN = None


def _roll_sign():
    """+1 if pltpu.roll matches jnp.roll (out[i] = in[i - shift]), else -1.

    Probed once per process on the active backend (do not mix backends after this)."""
    global _ROLL_SIGN
    if _ROLL_SIGN is None:
        def probe(x_ref, o_ref):
            o_ref[...] = pltpu.roll(x_ref[...], 1, 1)

        x = jnp.tile(jnp.arange(128, dtype=jnp.float32)[None, :], (8, 1))
        y = pl.pallas_call(
            probe, out_shape=jax.ShapeDtypeStruct((8, 128), jnp.float32))(x)
        _ROLL_SIGN = 1 if float(y[0, 0]) == 127.0 else -1
    return _ROLL_SIGN


def _bilinear_matrix(n_in):
    """(2*n_in, n_in) bilinear interpolation matrix, align_corners=True (PyTorch)."""
    n_out = 2 * n_in
    a = np.zeros((n_out, n_in), np.float32)
    for i in range(n_out):
        src = i * (n_in - 1) / (n_out - 1)
        i0 = min(int(np.floor(src)), n_in - 2)
        w1 = src - i0
        a[i, i0] += 1.0 - w1
        a[i, i0 + 1] += w1
    return a


def _upsample2x(x):
    """Separable bilinear x2 upsample, align_corners=True (linear memory, XLA-side)."""
    _, _, h, w = x.shape
    ah = jnp.asarray(_bilinear_matrix(h))            # (2h, h)
    aw = jnp.asarray(_bilinear_matrix(w))            # (2w, w)
    t = jnp.einsum('oh,nchw->ncow', ah, x)
    return jnp.einsum('pw,ncow->ncop', aw, t)


def _fp_mask(h, w, ll):
    m = np.zeros((h + 2, w + 2), np.float32)
    m[1:h + 1, 1:w + 1] = 1.0
    m = np.pad(m.reshape(-1), (0, ll - (h + 2) * (w + 2)))
    return jnp.asarray(m).reshape(1, ll)


def _to_fp(x, ll):
    """(N, C, H, W) -> (N, C, ll): zero-pad spatially by 1, flatten, pad lanes."""
    n, c, h, w = x.shape
    xp = jnp.pad(x, ((0, 0), (0, 0), (1, 1), (1, 1)))
    flat = xp.reshape(n, c, (h + 2) * (w + 2))
    return jnp.pad(flat, ((0, 0), (0, 0), (0, ll - (h + 2) * (w + 2))))


def _from_fp(xf, h, w):
    """(N, C, ll) flattened-padded -> (N, C, H, W) interior."""
    n, c, _ = xf.shape
    x = xf[..., :(h + 2) * (w + 2)].reshape(n, c, h + 2, w + 2)
    return x[:, :, 1:h + 1, 1:w + 1]


def _fold_bn(w, gamma, beta, mean, var, eps=1e-5):
    """Fold eval-mode BatchNorm2d into the (bias-free) conv preceding it."""
    scale = gamma / jnp.sqrt(var + eps)
    return w * scale[:, None, None, None], beta - scale * mean


def _flatten_w(w_eff, block_sizes):
    """(O, Cin, 3, 3) -> (O, 9*Cin), tap-major / channel-minor per input block."""
    o = w_eff.shape[0]
    parts, start = [], 0
    for cb in block_sizes:
        blk = w_eff[:, start:start + cb]                       # (O, cb, 3, 3)
        parts.append(jnp.transpose(blk, (0, 2, 3, 1)).reshape(o, 9 * cb))
        start += cb
    return jnp.concatenate(parts, axis=1)


# ----------------------------------------------------------------------------
# fused FCFM forward (two Pallas conv kernels + separable XLA upsampling)
# ----------------------------------------------------------------------------
def fcfm_forward(x1, x2, x3, params):
    n, c, h1, w1 = x1.shape
    _, _, h2, w2 = x2.shape
    _, _, h3, w3 = x3.shape
    assert (h2, w2) == (2 * h1, 2 * w1) and (h3, w3) == (2 * h2, 2 * w2)
    assert c % 16 == 0, "channel count assumed multiple of 16 (bf16 sublane packing)"

    l2, l3 = _ll_pad(h2, w2), _ll_pad(h3, w3)
    sign = _roll_sign()
    bf16 = jnp.bfloat16

    # ---- host-side constant folding: BN fold, torch.cat fold, bf16 cast --------
    def prep(p, blocks):
        w_eff, b_eff = _fold_bn(*p)
        return _flatten_w(w_eff, blocks).astype(bf16), b_eff[:, None]

    wu1, bu1 = _fold_bn(*params['up1'])
    wu4, bu4 = _fold_bn(*params['up4'])
    # conv_upsample1 / conv_upsample4 share the same input -> one stacked matmul.
    w14 = jnp.concatenate([_flatten_w(wu1, [c]), _flatten_w(wu4, [c])], 0).astype(bf16)
    b14 = jnp.concatenate([bu1, bu4])[:, None]
    wu2, bu2 = prep(params['up2'], [c])
    wu3, bu3 = prep(params['up3'], [c])
    wc2, bc2 = prep(params['cat2'], [c, c])
    wu5, bu5 = prep(params['up5'], [2 * c])
    wc3, bc3 = prep(params['cat3'], [c, 2 * c])
    wfn, bfn = prep(params['conv4'], [3 * c])
    m2, m3 = _fp_mask(h2, w2, l2), _fp_mask(h3, w3, l3)

    # ---- bilinear upsamples of the *inputs*: separable einsums, XLA-side --------
    u1 = _upsample2x(x1)                                   # (N, C, H2, W2)
    u1f = _to_fp(u1, l2)
    u11f = _to_fp(_upsample2x(u1), l3)
    u2f = _to_fp(_upsample2x(x2), l3)
    x2f, x3f = _to_fp(x2, l2), _to_fp(x3, l3)

    # ---- in-kernel 3x3 conv (+ folded BN / folded concat) -----------------------
    def conv3x3(blocks, wmat, bias, wd, cols_ref, mask=None):
        """im2col = 9 lane-rolls written into a reused bf16 scratch; one MXU matmul."""
        wp = wd + 2
        ll = blocks[0].shape[-1]
        row = 0
        for xb in blocks:                 # channel blocks of the (virtual) torch.cat
            cb = xb.shape[0]
            for dy in range(3):
                for dx in range(3):
                    sh = (sign * ((wp + 1) - (dy * wp + dx))) % ll
                    piece = xb if sh == 0 else pltpu.roll(xb, sh, 1)
                    cols_ref[row:row + cb, :ll] = piece.astype(bf16)
                    row += cb
        y = jnp.dot(wmat, cols_ref[:row, :ll],
                    preferred_element_type=jnp.float32) + bias
        return y if mask is None else y * mask      # re-zero the ring only where needed

    cdim = c

    def kernel_a(u1_ref, u11_ref, u2_ref, x2_ref, x3_ref,
                 w14_ref, b14_ref, wu2_ref, bu2_ref, wu3_ref, bu3_ref,
                 wc2_ref, bc2_ref, m2_ref,
                 x22_ref, x31_ref, cols):
        uu1, uu11, uu2 = u1_ref[0], u11_ref[0], u2_ref[0]
        xx2, xx3 = x2_ref[0], x3_ref[0]
        mk2 = m2_ref[...]

        # conv_upsample1 & conv_upsample4 fused (same input, stacked weights)
        y14 = conv3x3([uu1], w14_ref[...], b14_ref[...], w2, cols)
        c1 = y14[:cdim]                          # no mask: multiplied by xx2 (clean ring)
        c4 = y14[cdim:] * mk2                    # masked: rolled again by conv_concat2
        x2_1 = c1 * xx2
        # conv_concat2(cat(x2_1, conv_upsample4(up(x1_1)))) -- concat folded
        x22_ref[0] = conv3x3([x2_1, c4], wc2_ref[...], bc2_ref[...], w2, cols)

        cc2 = conv3x3([uu11], wu2_ref[...], bu2_ref[...], w3, cols)   # no mask (xx3 clean)
        cc3 = conv3x3([uu2], wu3_ref[...], bu3_ref[...], w3, cols)
        x31_ref[0] = cc2 * cc3 * xx3

    def kernel_b(x31_ref, u22_ref,
                 wu5_ref, bu5_ref, wc3_ref, bc3_ref, wfn_ref, bfn_ref, m3_ref,
                 out_ref, cols):
        x31, uu22 = x31_ref[0], u22_ref[0]
        mk3 = m3_ref[...]
        c5 = conv3x3([uu22], wu5_ref[...], bu5_ref[...], w3, cols, mask=mk3)
        # conv_concat3(cat(x3_1, conv_upsample5(up(x2_2)))) -- concat folded
        x32 = conv3x3([x31, c5], wc3_ref[...], bc3_ref[...], w3, cols, mask=mk3)
        out_ref[0] = conv3x3([x32], wfn_ref[...], bfn_ref[...], w3, cols)  # host strips ring

    def run(kernel, batch_arrays, const_arrays, out_shapes, scratch_rows, scratch_lanes):
        in_specs = ([pl.BlockSpec((1,) + a.shape[1:], lambda b: (b, 0, 0))
                     for a in batch_arrays]
                    + [pl.BlockSpec(a.shape, lambda b, _nd=a.ndim: (0,) * _nd)
                       for a in const_arrays])
        out_specs = [pl.BlockSpec((1,) + s.shape[1:], lambda b: (b, 0, 0))
                     for s in out_shapes]
        single = len(out_shapes) == 1
        return pl.pallas_call(
            kernel,
            out_shape=out_shapes[0] if single else tuple(out_shapes),
            grid_spec=pltpu.PrefetchScalarGridSpec(
                num_scalar_prefetch=0,
                grid=(n,),
                in_specs=in_specs,
                out_specs=out_specs[0] if single else tuple(out_specs),
                scratch_shapes=[pltpu.VMEM((scratch_rows, scratch_lanes), bf16)]),
            compiler_params=pltpu.CompilerParams(
                dimension_semantics=("parallel",),
                vmem_limit_bytes=_VMEM_LIMIT_BYTES),
        )(*batch_arrays, *const_arrays)

    # ---- kernel A: everything up to x2_2 and x3_1 -------------------------------
    x22f, x31f = run(
        kernel_a,
        [u1f, u11f, u2f, x2f, x3f],
        [w14, b14, wu2, bu2, wu3, bu3, wc2, bc2, m2],
        [jax.ShapeDtypeStruct((n, 2 * c, l2), jnp.float32),
         jax.ShapeDtypeStruct((n, c, l3), jnp.float32)],
        scratch_rows=18 * c, scratch_lanes=l3)

    # upsample(x2_2) depends on an in-kernel intermediate -> separable XLA upsample.
    u22f = _to_fp(_upsample2x(_from_fp(x22f, h2, w2)), l3)

    # ---- kernel B: conv_upsample5 + conv_concat3 + conv4 -------------------------
    outf = run(
        kernel_b,
        [x31f, u22f],
        [wu5, bu5, wc3, bc3, wfn, bfn, m3],
        [jax.ShapeDtypeStruct((n, c, l3), jnp.float32)],
        scratch_rows=27 * c, scratch_lanes=l3)

    return _from_fp(outf, h3, w3)


# ----------------------------------------------------------------------------
# synthetic parameters + pure-JAX reference
# ----------------------------------------------------------------------------
def init_params(key, channel):
    """Synthetic FCFM parameters: per conv (weight, bn_gamma, bn_beta, bn_mean, bn_var)."""
    def conv_bn(k, cin, cout):
        kw, kg, kb, km, kv = jax.random.split(k, 5)
        return (0.1 * jax.random.normal(kw, (cout, cin, 3, 3), jnp.float32),
                1.0 + 0.1 * jax.random.normal(kg, (cout,), jnp.float32),
                0.1 * jax.random.normal(kb, (cout,), jnp.float32),
                0.1 * jax.random.normal(km, (cout,), jnp.float32),
                1.0 + 0.2 * jax.random.uniform(kv, (cout,), jnp.float32))

    ks = jax.random.split(key, 8)
    ch = channel
    return {
        'up1': conv_bn(ks[0], ch, ch),
        'up2': conv_bn(ks[1], ch, ch),
        'up3': conv_bn(ks[2], ch, ch),
        'up4': conv_bn(ks[3], ch, ch),
        'up5': conv_bn(ks[4], 2 * ch, 2 * ch),
        'cat2': conv_bn(ks[5], 2 * ch, 2 * ch),
        'cat3': conv_bn(ks[6], 3 * ch, 3 * ch),
        'conv4': conv_bn(ks[7], 3 * ch, ch),
    }


def fcfm_reference(x1, x2, x3, params):
    """Pure-JAX/XLA reference (independent conv path via lax.conv_general_dilated)."""
    def upsample(x):
        _, _, h, w = x.shape
        ah = jnp.asarray(_bilinear_matrix(h))
        aw = jnp.asarray(_bilinear_matrix(w))
        return jnp.einsum('oh,nchw,pw->ncop', ah, x, aw)

    def basic_conv(x, p):
        w_eff, b_eff = _fold_bn(*p)
        y = jax.lax.conv_general_dilated(
            x, w_eff, window_strides=(1, 1), padding=((1, 1), (1, 1)),
            dimension_numbers=('NCHW', 'OIHW', 'NCHW'))
        return y + b_eff[None, :, None, None]

    u1 = upsample(x1)
    x2_1 = basic_conv(u1, params['up1']) * x2
    x3_1 = (basic_conv(upsample(u1), params['up2'])
            * basic_conv(upsample(x2), params['up3']) * x3)
    x2_2 = jnp.concatenate([x2_1, basic_conv(u1, params['up4'])], axis=1)
    x2_2 = basic_conv(x2_2, params['cat2'])
    x3_2 = jnp.concatenate([x3_1, basic_conv(upsample(x2_2), params['up5'])], axis=1)
    x3_2 = basic_conv(x3_2, params['cat3'])
    return basic_conv(x3_2, params['conv4'])


if __name__ == "__main__":
    key = jax.random.PRNGKey(0)
    kx1, kx2, kx3, kp = jax.random.split(key, 4)

    C = 16
    x1 = jax.random.normal(kx1, (2, C, 8, 8), jnp.float32)      # coarsest level
    x2 = jax.random.normal(kx2, (2, C, 16, 16), jnp.float32)
    x3 = jax.random.normal(kx3, (2, C, 32, 32), jnp.float32)    # finest level
    params = init_params(kp, C)

    out = fcfm_forward(x1, x2, x3, params)
    out = jax.block_until_ready(out)

    ref = fcfm_reference(x1, x2, x3, params)
    assert out.shape == ref.shape == (2, C, 32, 32)
    err = float(jnp.max(jnp.abs(out - ref)))
    scale = float(jnp.max(jnp.abs(ref)))
    # bf16 weights/im2col (f32 accumulation) -> slightly looser tolerance than pure f32.
    assert err <= 3e-2 * (1.0 + scale), f"mismatch: err={err}, scale={scale}"

    print("KERNEL_OK")
</pallas_src>

<mosaic_0001>
module attributes {stable_mosaic.version = 11 : i64} {
  func.func @probe(%arg0: memref<8x128xf32, #tpu.memory_space<vmem>>, %arg1: memref<8x128xf32, #tpu.memory_space<vmem>>) attributes {dimension_semantics = [], scalar_prefetch = 0 : i64, scratch_operands = 0 : i64, tpu.core_type = #tpu.core_type<tc>} {
    %c0 = arith.constant 0 : index
    %c0_0 = arith.constant 0 : index
    %0 = vector.load %arg0[%c0, %c0_0] : memref<8x128xf32, #tpu.memory_space<vmem>>, vector<8x128xf32>
    %c1_i32 = arith.constant 1 : i32
    %1 = tpu.dynamic_rotate %0 by %c1_i32 dim 1 : vector<8x128xf32>, i32 -> vector<8x128xf32>
    %c0_1 = arith.constant 0 : index
    %c0_2 = arith.constant 0 : index
    %2 = vector.load %arg1[%c0_1, %c0_2] : memref<8x128xf32, #tpu.memory_space<vmem>>, vector<8x128xf32>
    tpu.vector_store %arg1[%c0_1, %c0_2], %1 {strides = array<i32>} : memref<8x128xf32, #tpu.memory_space<vmem>>, vector<8x128xf32>,
    return
  }
}

</mosaic_0001>

<llo_original>
// kernel: tpu_custom_call.1
$region0: #{tpu_custom_call.1}
  #allocation0 [shape = 'u32[]', space=smem, size = 0x4, offset = 0x4, fixed_abs, tag = 'smem constant byte address 0x4 - core index']
  #allocation1 [shape = 'u32[144,128]{1,0:T(1,128)}', space=vmem, size = 0x12000, scoped, tag = 'internal scratch']
  %s0 = inlined_call_operand.hbm [shape: f32[8,128], index: 0, kind: input, shape index: {}]
  %s1 = inlined_call_operand.hbm [shape: f32[8,128], index: 1, kind: output, shape index: {}]
  %s2 = sld [smem:[#allocation0]]
  $region18: #{tpu_custom_call.1} parent=0
    _
  %s4 = ssub.s32 1, %s2
  %s5 = scalar_select 0, %s4, %s2
  $region1: #{tpu_custom_call.1} parent=0
    #allocation2 [shape = 'u8[4096]{0}', space=vmem, size = 0x1000, scoped, tag = 'input window, operand 0, single buffered']
    #allocation3 [shape = 's32[1]{0}', space=sflag, size = 0x4, scoped, tag = 'scoped memory for tpu_custom_call.1']
    #allocation4 [shape = 's32[1]{0}', space=sflag, size = 0x4, scoped, tag = 'scoped memory for tpu_custom_call.1']
    #allocation5 [shape = 'u8[4096]{0}', space=vmem, size = 0x1000, scoped, tag = 'output window, operand 0, single buffered']
    %6 = vsyncpa [#allocation3], 0
    %7 = vsyncpa [#allocation4], 0
    // Predicated region
    $region2: #{tpu_custom_call.1} parent=1 // pred_check
      _
    $region3: #{tpu_custom_call.1} parent=1 // pred_check_branch
      %9 = sbr.rel (0) target = $region5
    $region4: #{tpu_custom_call.1} parent=1 // pred_region
      %s11 = ssub.s32 128, 128
      %12 = vsyncadd [#allocation3], %s11
      %s14 = sshll.u32 [#allocation2], 4
      %s15 = int_to_ptr.vmem [resolvable:$true] %s14
      %17 = dma.hbm_to_vmem [thread:$0]  %s0, 128, %s15, [#allocation3]
    $region5: #{tpu_custom_call.1} parent=1 // pred_fallthru
      _
    // Predicated region
    $region6: #{tpu_custom_call.1} parent=1 // pred_check
      _
    $region7: #{tpu_custom_call.1} parent=1 // pred_check_branch
      %19 = sbr.rel (0) target = $region9
    $region8: #{tpu_custom_call.1} parent=1 // pred_region
      %20 = dma.done [#allocation3], 128
    $region9: #{tpu_custom_call.1} parent=1 // pred_fallthru
      _
    %v21 = vld [vmem:[#allocation2] sm:$0xff]
    %22 = vrot.lane.b32.xlu0 %v21, 1
    %v23 = vpop.permute.xlu0 %22
    %24 = vst [vmem:[#allocation5] sm:$0xff] %v23
    // Predicated region
    $region10: #{tpu_custom_call.1} parent=1 // pred_check
      _
    $region11: #{tpu_custom_call.1} parent=1 // pred_check_branch
      %26 = sbr.rel (0) target = $region13
    $region12: #{tpu_custom_call.1} parent=1 // pred_region
      %s28 = ssub.s32 128, 128
      %29 = vsyncadd [#allocation4], %s28
      %s31 = sshll.u32 [#allocation5], 4
      %s32 = int_to_ptr.vmem [resolvable:$true] %s31
      %34 = dma.vmem_to_hbm [thread:$0]  %s32, 128, %s1, [#allocation4]
    $region13: #{tpu_custom_call.1} parent=1 // pred_fallthru
      _
    // Predicated region
    $region14: #{tpu_custom_call.1} parent=1 // pred_check
      _
    $region15: #{tpu_custom_call.1} parent=1 // pred_check_branch
      %36 = sbr.rel (0) target = $region17
    $region16: #{tpu_custom_call.1} parent=1 // pred_region
      %37 = dma.done [#allocation4], 128
    $region17: #{tpu_custom_call.1} parent=1 // pred_fallthru
      _
    %38 = vsyncpa [#allocation3], 1
    %39 = vsyncpa [#allocation4], 1

</llo_original>
